<compile_context>
chip_gen: v7x
topology: tpu7x:2x2x1
jax: 0.10.0
libtpu: 0.0.40
codegen_flags: <defaults>
</compile_context>

<pallas_src>
import functools

import jax
import jax.numpy as jnp
from jax.experimental import pallas as pl
from jax.experimental.pallas import tpu as pltpu


def _adapt_conv_kernel(x_ref, w_ref, shift_ref, o_ref, *, tap_offsets, lp):
    """One batch element per grid step, one fused matmul.

    x_ref:     (1, Cin, Lext)        bf16 over-padded, flattened padded input
    w_ref:     (Cout, KH*KW*Cin)     bf16 BN-scale-folded weights, tap-major K
    shift_ref: (Cout, 1)             f32 folded BN shift
    o_ref:     (1, Cout, Lp)         output in padded-flattened spatial space
    """
    # Statically shifted lane windows, one per conv tap; stacking them along
    # the sublane (contraction) axis turns the whole conv into a single
    # (Cout, K) x (K, Lp) MXU matmul with K = KH*KW*Cin.
    taps = [x_ref[0, :, pl.ds(off, lp)] for off in tap_offsets]
    stacked = jnp.concatenate(taps, axis=0)                 # (K, Lp) bf16

    acc = jnp.dot(w_ref[...], stacked,
                  preferred_element_type=jnp.float32)       # (Cout, Lp) f32

    # Folded BatchNorm shift (scale already in the weights) + ReLU, in f32.
    y = jnp.maximum(acc + shift_ref[...], 0.0)
    o_ref[0] = y.astype(o_ref.dtype)


def adapt_layer_forward(x_nchw, weight, bn_gamma, bn_beta, bn_mean, bn_var,
                        bn_eps=1e-3):
    """Conv2d(bias=False, stride=1, pad='same') + BN(eval) + ReLU.

    x_nchw: (N, Cin, H, W)   weight: (Cout, Cin, KH, KW)  (PyTorch layout)
    returns (N, Cout, H, W), dtype of x_nchw.
    """
    n, cin, h, w = x_nchw.shape
    cout, cin_w, kh, kw = weight.shape
    assert cin == cin_w
    assert kh % 2 == 1 and kw % 2 == 1, "only odd 'same' kernels supported"
    pad_h, pad_w = kh // 2, kw // 2

    hp, wp = h + 2 * pad_h, w + 2 * pad_w
    lv = hp * wp                                       # padded-flattened length
    lp = ((lv + 127) // 128) * 128                     # lane-dense output length
    max_s = pad_h * wp + pad_w                         # max |tap shift| in lanes
    lext = ((lp + 2 * max_s + 127) // 128) * 128       # over-padded input length

    # ---- wrapper glue: stay NCHW, pad + flatten spatial, cast to bf16 ----
    x_pad = jnp.pad(x_nchw, ((0, 0), (0, 0), (pad_h, pad_h), (pad_w, pad_w)))
    x_flat = x_pad.reshape(n, cin, lv)
    x_ext = jnp.pad(x_flat, ((0, 0), (0, 0), (max_s, lext - lv - max_s)))
    x_ext = x_ext.astype(jnp.bfloat16)

    # Fold BN(eval) scale into the conv weights; keep only the additive shift.
    scale = bn_gamma / jnp.sqrt(bn_var + bn_eps)                    # (Cout,)
    w_folded = weight * scale[:, None, None, None]                  # (Cout,Cin,KH,KW)
    # Tap-major contraction index: K = (kh*KW + kw)*Cin + c.
    w_mat = jnp.transpose(w_folded, (0, 2, 3, 1)).reshape(cout, kh * kw * cin)
    w_mat = w_mat.astype(jnp.bfloat16)
    shift = (bn_beta - bn_mean * scale).reshape(cout, 1).astype(jnp.float32)

    # Static lane offsets of each tap's shifted window inside x_ext.
    tap_offsets = tuple(max_s + (ikh - pad_h) * wp + (ikw - pad_w)
                        for ikh in range(kh) for ikw in range(kw))

    kernel = functools.partial(_adapt_conv_kernel,
                               tap_offsets=tap_offsets, lp=lp)

    out_itemsize = jnp.dtype(x_nchw.dtype).itemsize
    cost = pl.CostEstimate(
        flops=2 * n * cout * (kh * kw * cin) * lp,
        transcendentals=0,
        bytes_accessed=int(n * cin * lext * 2            # bf16 input
                           + cout * kh * kw * cin * 2    # bf16 weights
                           + cout * 4                    # f32 shift
                           + n * cout * lp * out_itemsize))

    y_pad = pl.pallas_call(
        kernel,
        out_shape=jax.ShapeDtypeStruct((n, cout, lp), x_nchw.dtype),
        grid_spec=pltpu.PrefetchScalarGridSpec(
            num_scalar_prefetch=0,
            grid=(n,),
            in_specs=[
                pl.BlockSpec((1, cin, lext), lambda b: (b, 0, 0)),
                pl.BlockSpec((cout, kh * kw * cin), lambda b: (0, 0)),
                pl.BlockSpec((cout, 1), lambda b: (0, 0)),
            ],
            out_specs=pl.BlockSpec((1, cout, lp), lambda b: (b, 0, 0)),
        ),
        compiler_params=pltpu.CompilerParams(
            dimension_semantics=("parallel",),
            vmem_limit_bytes=32 * 1024 * 1024),
        cost_estimate=cost,
    )(x_ext, w_mat, shift)

    # Output is already NCHW-flat; crop the padded spatial ring (cheap slice
    # that XLA fuses into the consumer at these sizes).
    y = y_pad[:, :, :lv].reshape(n, cout, hp, wp)
    return y[:, :, pad_h:pad_h + h, pad_w:pad_w + w]


def _reference_f32(x, weight, bn_gamma, bn_beta, bn_mean, bn_var, bn_eps=1e-3):
    y = jax.lax.conv_general_dilated(
        x.astype(jnp.float32), weight.astype(jnp.float32),
        window_strides=(1, 1), padding="SAME",
        dimension_numbers=("NCHW", "OIHW", "NCHW"))
    scale = (bn_gamma / jnp.sqrt(bn_var + bn_eps)).reshape(1, -1, 1, 1)
    shift = (bn_beta - bn_mean * bn_gamma / jnp.sqrt(bn_var + bn_eps)).reshape(1, -1, 1, 1)
    return jnp.maximum(y * scale + shift, 0.0)


def _reference_bf16_operands(x, weight, bn_gamma, bn_beta, bn_mean, bn_var,
                             bn_eps=1e-3):
    # Same operand rounding as the kernel (bf16 x / folded w), f32 math.
    scale = bn_gamma / jnp.sqrt(bn_var + bn_eps)
    w_folded = (weight * scale[:, None, None, None]).astype(jnp.bfloat16)
    x_b = x.astype(jnp.bfloat16)
    y = jax.lax.conv_general_dilated(
        x_b.astype(jnp.float32), w_folded.astype(jnp.float32),
        window_strides=(1, 1), padding="SAME",
        dimension_numbers=("NCHW", "OIHW", "NCHW"))
    shift = (bn_beta - bn_mean * scale).reshape(1, -1, 1, 1)
    return jnp.maximum(y + shift, 0.0)


if __name__ == "__main__":
    # block_cfg equivalent: in_channel=4, num_filters=[8], kernel_size=[3],
    # strides=[1], padding=[1], block_type=['conv2d'].
    N, CIN, H, W = 2, 4, 16, 16
    COUT, KH, KW = 8, 3, 3

    key = jax.random.PRNGKey(0)
    k_x, k_w = jax.random.split(key)

    x = jax.random.normal(k_x, (N, CIN, H, W), dtype=jnp.float32)

    # Deterministic xavier_normal_ init for the conv weight (bias=False).
    fan_in = CIN * KH * KW
    fan_out = COUT * KH * KW
    xavier_std = (2.0 / (fan_in + fan_out)) ** 0.5
    weight = xavier_std * jax.random.normal(k_w, (COUT, CIN, KH, KW),
                                            dtype=jnp.float32)

    # BatchNorm2d eval-mode running stats; pcdet uses eps=1e-3.
    bn_gamma = jnp.ones((COUT,), jnp.float32)
    bn_beta = jnp.zeros((COUT,), jnp.float32)
    bn_mean = jnp.zeros((COUT,), jnp.float32)
    bn_var = jnp.ones((COUT,), jnp.float32)

    out = adapt_layer_forward(x, weight, bn_gamma, bn_beta, bn_mean, bn_var)
    out = jax.block_until_ready(out)
    assert out.shape == (N, COUT, H, W)

    # Tight check vs a reference with identical (bf16) operand rounding.
    ref_bf = _reference_bf16_operands(x, weight, bn_gamma, bn_beta, bn_mean,
                                      bn_var)
    assert jnp.allclose(out, ref_bf, atol=1e-3, rtol=1e-3)

    # Loose sanity check vs the pure-f32 reference (bf16 quantization noise).
    ref32 = _reference_f32(x, weight, bn_gamma, bn_beta, bn_mean, bn_var)
    assert jnp.allclose(out, ref32, atol=5e-2, rtol=5e-2)

    print("KERNEL_OK")
</pallas_src>

<mosaic_0001>
module attributes {stable_mosaic.version = 11 : i64} {
  func.func @_adapt_conv_kernel(%arg0: i32, %arg1: memref<1x4x512xbf16, #tpu.memory_space<vmem>>, %arg2: memref<8x36xbf16, #tpu.memory_space<vmem>>, %arg3: memref<8x1xf32, #tpu.memory_space<vmem>>, %arg4: memref<1x8x384xf32, #tpu.memory_space<vmem>>) attributes {dimension_semantics = [#tpu.dimension_semantics<parallel>], iteration_bounds = array<i64: 2>, scalar_prefetch = 0 : i64, scratch_operands = 0 : i64, tpu.core_type = #tpu.core_type<tc>, window_params = [{transform_indices = @transform_0, window_bounds = array<i64: 1, 4, 512>}, {pipeline_mode = #tpu.pipeline_mode<synchronous>, transform_indices = @transform_1, window_bounds = array<i64: 8, 36>}, {pipeline_mode = #tpu.pipeline_mode<synchronous>, transform_indices = @transform_2, window_bounds = array<i64: 8, 1>}, {transform_indices = @transform_3, window_bounds = array<i64: 1, 8, 384>}]} {
    %c0 = arith.constant 0 : index
    %c0_0 = arith.constant 0 : index
    %c0_1 = arith.constant 0 : index
    %0 = vector.load %arg1[%c0, %c0_0, %c0_1] : memref<1x4x512xbf16, #tpu.memory_space<vmem>>, vector<1x4x384xbf16>
    %1 = vector.shape_cast %0 : vector<1x4x384xbf16> to vector<4x384xbf16>
    %c0_2 = arith.constant 0 : index
    %c0_3 = arith.constant 0 : index
    %c1 = arith.constant 1 : index
    %2 = vector.load %arg1[%c0_2, %c0_3, %c1] : memref<1x4x512xbf16, #tpu.memory_space<vmem>>, vector<1x4x384xbf16>
    %3 = vector.shape_cast %2 : vector<1x4x384xbf16> to vector<4x384xbf16>
    %c0_4 = arith.constant 0 : index
    %c0_5 = arith.constant 0 : index
    %c2 = arith.constant 2 : index
    %4 = vector.load %arg1[%c0_4, %c0_5, %c2] : memref<1x4x512xbf16, #tpu.memory_space<vmem>>, vector<1x4x384xbf16>
    %5 = vector.shape_cast %4 : vector<1x4x384xbf16> to vector<4x384xbf16>
    %c0_6 = arith.constant 0 : index
    %c0_7 = arith.constant 0 : index
    %c18 = arith.constant 18 : index
    %6 = vector.load %arg1[%c0_6, %c0_7, %c18] : memref<1x4x512xbf16, #tpu.memory_space<vmem>>, vector<1x4x384xbf16>
    %7 = vector.shape_cast %6 : vector<1x4x384xbf16> to vector<4x384xbf16>
    %c0_8 = arith.constant 0 : index
    %c0_9 = arith.constant 0 : index
    %c19 = arith.constant 19 : index
    %8 = vector.load %arg1[%c0_8, %c0_9, %c19] : memref<1x4x512xbf16, #tpu.memory_space<vmem>>, vector<1x4x384xbf16>
    %9 = vector.shape_cast %8 : vector<1x4x384xbf16> to vector<4x384xbf16>
    %c0_10 = arith.constant 0 : index
    %c0_11 = arith.constant 0 : index
    %c20 = arith.constant 20 : index
    %10 = vector.load %arg1[%c0_10, %c0_11, %c20] : memref<1x4x512xbf16, #tpu.memory_space<vmem>>, vector<1x4x384xbf16>
    %11 = vector.shape_cast %10 : vector<1x4x384xbf16> to vector<4x384xbf16>
    %c0_12 = arith.constant 0 : index
    %c0_13 = arith.constant 0 : index
    %c36 = arith.constant 36 : index
    %12 = vector.load %arg1[%c0_12, %c0_13, %c36] : memref<1x4x512xbf16, #tpu.memory_space<vmem>>, vector<1x4x384xbf16>
    %13 = vector.shape_cast %12 : vector<1x4x384xbf16> to vector<4x384xbf16>
    %c0_14 = arith.constant 0 : index
    %c0_15 = arith.constant 0 : index
    %c37 = arith.constant 37 : index
    %14 = vector.load %arg1[%c0_14, %c0_15, %c37] : memref<1x4x512xbf16, #tpu.memory_space<vmem>>, vector<1x4x384xbf16>
    %15 = vector.shape_cast %14 : vector<1x4x384xbf16> to vector<4x384xbf16>
    %c0_16 = arith.constant 0 : index
    %c0_17 = arith.constant 0 : index
    %c38 = arith.constant 38 : index
    %16 = vector.load %arg1[%c0_16, %c0_17, %c38] : memref<1x4x512xbf16, #tpu.memory_space<vmem>>, vector<1x4x384xbf16>
    %17 = vector.shape_cast %16 : vector<1x4x384xbf16> to vector<4x384xbf16>
    %18 = tpu.concatenate %1, %3, %5, %7, %9, %11, %13, %15, %17 in 0 : vector<4x384xbf16>, vector<4x384xbf16>, vector<4x384xbf16>, vector<4x384xbf16>, vector<4x384xbf16>, vector<4x384xbf16>, vector<4x384xbf16>, vector<4x384xbf16>, vector<4x384xbf16> -> vector<36x384xbf16>
    %c0_18 = arith.constant 0 : index
    %c0_19 = arith.constant 0 : index
    %19 = vector.load %arg2[%c0_18, %c0_19] : memref<8x36xbf16, #tpu.memory_space<vmem>>, vector<8x36xbf16>
    %cst = arith.constant dense<0.000000e+00> : vector<8x384xf32>
    %20 = tpu.matmul %19, %18, %cst {dimension_numbers = #tpu.dot_dimension_numbers<[1], [0], [0], [1], [0, 0, 1, 1], [], []>} : vector<8x36xbf16>, vector<36x384xbf16>, vector<8x384xf32> -> vector<8x384xf32>
    %c0_20 = arith.constant 0 : index
    %c0_21 = arith.constant 0 : index
    %21 = vector.load %arg3[%c0_20, %c0_21] : memref<8x1xf32, #tpu.memory_space<vmem>>, vector<8x1xf32>
    %22 = vector.broadcast %21 : vector<8x1xf32> to vector<8x384xf32>
    %23 = arith.addf %20, %22 : vector<8x384xf32>
    %cst_22 = arith.constant 0.000000e+00 : f32
    %24 = vector.broadcast %cst_22 : f32 to vector<8x384xf32>
    %25 = arith.maximumf %23, %24 : vector<8x384xf32>
    %c0_23 = arith.constant 0 : index
    %c0_24 = arith.constant 0 : index
    %c0_25 = arith.constant 0 : index
    %26 = vector.load %arg4[%c0_23, %c0_24, %c0_25] : memref<1x8x384xf32, #tpu.memory_space<vmem>>, vector<1x8x384xf32>
    %27 = vector.shape_cast %26 : vector<1x8x384xf32> to vector<8x384xf32>
    %28 = vector.shape_cast %25 : vector<8x384xf32> to vector<1x8x384xf32>
    tpu.vector_store %arg4[%c0_23, %c0_24, %c0_25], %28 {strides = array<i32>} : memref<1x8x384xf32, #tpu.memory_space<vmem>>, vector<1x8x384xf32>,
    return
  }
  func.func @transform_0(%arg0: i32) -> (i32, i32, i32) {
    %c0_i32 = arith.constant 0 : i32
    %c0_i32_0 = arith.constant 0 : i32
    %c0_i32_1 = arith.constant 0 : i32
    return %arg0, %c0_i32, %c0_i32_0 : i32, i32, i32
  }
  func.func @transform_1(%arg0: i32) -> (i32, i32) {
    %c0_i32 = arith.constant 0 : i32
    %c0_i32_0 = arith.constant 0 : i32
    %c0_i32_1 = arith.constant 0 : i32
    return %c0_i32, %c0_i32_0 : i32, i32
  }
  func.func @transform_2(%arg0: i32) -> (i32, i32) {
    %c0_i32 = arith.constant 0 : i32
    %c0_i32_0 = arith.constant 0 : i32
    %c0_i32_1 = arith.constant 0 : i32
    return %c0_i32, %c0_i32_0 : i32, i32
  }
  func.func @transform_3(%arg0: i32) -> (i32, i32, i32) {
    %c0_i32 = arith.constant 0 : i32
    %c0_i32_0 = arith.constant 0 : i32
    %c0_i32_1 = arith.constant 0 : i32
    return %arg0, %c0_i32, %c0_i32_0 : i32, i32, i32
  }
}

</mosaic_0001>

<llo_original>
// kernel: tpu_custom_call.1
$region0: #{tpu_custom_call.1}
  #allocation0 [shape = 'u32[]', space=smem, size = 0x4, offset = 0x4, fixed_abs, tag = 'smem constant byte address 0x4 - core index']
  #allocation1 [shape = 'u32[144,128]{1,0:T(1,128)}', space=vmem, size = 0x12000, scoped, tag = 'internal scratch']
  %s0 = inlined_call_operand.hbm [shape: bf16[2,4,512], index: 0, kind: input, shape index: {}]
  %s1 = inlined_call_operand.vmem [shape: bf16[8,36], index: 1, kind: input, shape index: {}]
  %s2 = inlined_call_operand.vmem [shape: f32[8,1], index: 2, kind: input, shape index: {}]
  %s3 = inlined_call_operand.hbm [shape: f32[2,8,384], index: 3, kind: output, shape index: {}]
  %s4 = sld [smem:[#allocation0]]
  $region49: #{tpu_custom_call.1} parent=0
    _
  %s6 = ssub.s32 1, %s4
  %s7 = scalar_select 0, %s6, %s4
  $region1: #{tpu_custom_call.1} parent=0
    #allocation2 [shape = 'u8[8192]{0}', space=vmem, size = 0x2000, scoped, tag = 'input window, operand 0']
    #allocation3 [shape = 's32[2]{0}', space=sflag, size = 0x8, scoped, tag = 'scoped memory for tpu_custom_call.1']
    #allocation4 [shape = 's32[2]{0}', space=sflag, size = 0x8, scoped, tag = 'scoped memory for tpu_custom_call.1']
    #allocation5 [shape = 'u8[24576]{0}', space=vmem, size = 0x6000, scoped, tag = 'output window, operand 0']
    %8 = vsyncpa [#allocation3], 0
    %s9 = scalar_lea.sflag [#allocation3], 1
    %10 = vsyncpa %s9, 0
    %11 = vsyncpa [#allocation4], 0
    %s12 = scalar_lea.sflag [#allocation4], 1
    %13 = vsyncpa %s12, 0
    loop: start=0, step=1, limit=4
    $region2: #{tpu_custom_call.1} parent=1 // loop_pre_header
      _
    $region3: #{tpu_custom_call.1} parent=1 // loop_header
      %s15 = sphi 0, %s19
      %p16 = scmp.ge.s32.totalorder %s15, 4
      %s25 = sphi 0, %s27
      %s28 = sphi 0, %s25
      %s29 = sphi 0, %s28
      %s45 = sphi 0, %s29
      %s49 = sphi 0, %s49
      %s51 = sphi 0, %s49
      %s52 = sphi 0, %s51
      %s66 = sphi 0, %s52
      %s70 = sphi 0, %s70
      %s72 = sphi 0, %s70
      %s73 = sphi 0, %s72
      %s87 = sphi 0, %s73
      %s93 = sphi 0, %s95
      %s96 = sphi 0, %s93
      %s97 = sphi 0, %s96
      %s113 = sphi 0, %s97
    $region4: #{tpu_custom_call.1} parent=1 // loop_header_branch
      %18 = sbr.rel (%p16) target = $region8
    $region5: #{tpu_custom_call.1} parent=1 // loop_body
      %s20 = ssub.s32 %s15, 1
      %s21 = ssub.s32 %s15, 2
      %s22 = sadd.s32 %s15, 1
      %s23 = ssub.s32 %s15, %s22
      %p24 = scmp.eq.s32.totalorder %s23, 0
      %s26 = sadd.s32 %s25, 1
      %s27 = scalar_select %p24, %s25, %s26
      %p30 = pneg %p24
      %p31 = scmp.eq.s32.totalorder %s15, 1
      %p32 = por %p30, %p31
      %p33 = scmp.ne.s32.totalorder %s25, %s28
      %p34 = scmp.eq.s32.totalorder %s15, 0
      %p35 = por %p33, %p34
      %p36 = scmp.ne.s32.totalorder %s25, %s28
      %p37 = scmp.eq.s32.totalorder %s20, 1
      %p38 = por %p36, %p37
      %p39 = scmp.ne.s32.totalorder %s28, %s29
      %p40 = scmp.eq.s32.totalorder %s20, 0
      %p41 = por %p39, %p40
      %p42 = scmp.ne.s32.totalorder %s28, %s29
      %p43 = scmp.eq.s32.totalorder %s21, 1
      %p44 = por %p42, %p43
      %p46 = scmp.ne.s32.totalorder %s29, %s45
      %p47 = scmp.eq.s32.totalorder %s21, 0
      %p48 = por %p46, %p47
      %s50 = sadd.s32 %s49, 1
      %p53 = scmp.eq.s32.totalorder %s15, 1
      %p54 = scmp.ne.s32.totalorder %s49, %s51
      %p55 = scmp.eq.s32.totalorder %s15, 0
      %p56 = por %p54, %p55
      %p57 = scmp.ne.s32.totalorder %s49, %s51
      %p58 = scmp.eq.s32.totalorder %s20, 1
      %p59 = por %p57, %p58
      %p60 = scmp.ne.s32.totalorder %s51, %s52
      %p61 = scmp.eq.s32.totalorder %s20, 0
      %p62 = por %p60, %p61
      %p63 = scmp.ne.s32.totalorder %s51, %s52
      %p64 = scmp.eq.s32.totalorder %s21, 1
      %p65 = por %p63, %p64
      %p67 = scmp.ne.s32.totalorder %s52, %s66
      %p68 = scmp.eq.s32.totalorder %s21, 0
      %p69 = por %p67, %p68
      %s71 = sadd.s32 %s70, 1
      %p74 = scmp.eq.s32.totalorder %s15, 1
      %p75 = scmp.ne.s32.totalorder %s70, %s72
      %p76 = scmp.eq.s32.totalorder %s15, 0
      %p77 = por %p75, %p76
      %p78 = scmp.ne.s32.totalorder %s70, %s72
      %p79 = scmp.eq.s32.totalorder %s20, 1
      %p80 = por %p78, %p79
      %p81 = scmp.ne.s32.totalorder %s72, %s73
      %p82 = scmp.eq.s32.totalorder %s20, 0
      %p83 = por %p81, %p82
      %p84 = scmp.ne.s32.totalorder %s72, %s73
      %p85 = scmp.eq.s32.totalorder %s21, 1
      %p86 = por %p84, %p85
      %p88 = scmp.ne.s32.totalorder %s73, %s87
      %p89 = scmp.eq.s32.totalorder %s21, 0
      %p90 = por %p88, %p89
      %s91 = ssub.s32 %s15, %s22
      %p92 = scmp.eq.s32.totalorder %s91, 0
      %s94 = sadd.s32 %s93, 1
      %s95 = scalar_select %p92, %s93, %s94
      %p98 = pneg %p92
      %p99 = scmp.eq.s32.totalorder %s15, 1
      %p100 = por %p98, %p99
      %p101 = scmp.ne.s32.totalorder %s93, %s96
      %p102 = scmp.eq.s32.totalorder %s15, 0
      %p103 = por %p101, %p102
      %p104 = scmp.ne.s32.totalorder %s93, %s96
      %p105 = scmp.eq.s32.totalorder %s20, 1
      %p106 = por %p104, %p105
      %p107 = scmp.ne.s32.totalorder %s96, %s97
      %p108 = scmp.eq.s32.totalorder %s20, 0
      %p109 = por %p107, %p108
      %p110 = scmp.ne.s32.totalorder %s96, %s97
      %p111 = scmp.eq.s32.totalorder %s21, 1
      %p112 = por %p110, %p111
      %p114 = scmp.ne.s32.totalorder %s97, %s113
      %p115 = scmp.eq.s32.totalorder %s21, 0
      %p116 = por %p114, %p115
      %p117 = scmp.le.s32.totalorder 1, %s15
      %p118 = scmp.lt.s32.totalorder %s15, 3
      %p119 = pnand %p117, %p118
      %p120 = pneg %p119
      // Predicated region
      $region9: #{tpu_custom_call.1} parent=5 // pred_check
        _
      $region10: #{tpu_custom_call.1} parent=5 // pred_check_branch
        %122 = sbr.rel (%p119) target = $region12
      $region11: #{tpu_custom_call.1} parent=5 // pred_region
        %s123 = ssub.s32 %s15, 1
        // Predicated region
        $region13: #{tpu_custom_call.1} parent=11 // pred_check
          %p124 = pneg %p62
        $region14: #{tpu_custom_call.1} parent=11 // pred_check_branch
          %126 = sbr.rel (%p124) target = $region16
        $region15: #{tpu_custom_call.1} parent=11 // pred_region
          _
        $region16: #{tpu_custom_call.1} parent=11 // pred_fallthru
          _
        // Predicated region
        $region17: #{tpu_custom_call.1} parent=11 // pred_check
          %p127 = pneg %p83
        $region18: #{tpu_custom_call.1} parent=11 // pred_check_branch
          %129 = sbr.rel (%p127) target = $region20
        $region19: #{tpu_custom_call.1} parent=11 // pred_region
          _
        $region20: #{tpu_custom_call.1} parent=11 // pred_fallthru
          _
      $region12: #{tpu_custom_call.1} parent=5 // pred_fallthru
        _
      %p130 = scmp.lt.s32.totalorder %s15, 2
      // Predicated region
      $region21: #{tpu_custom_call.1} parent=5 // pred_check
        %p131 = pneg %p130
      $region22: #{tpu_custom_call.1} parent=5 // pred_check_branch
        %133 = sbr.rel (%p131) target = $region24
      $region23: #{tpu_custom_call.1} parent=5 // pred_region
        // Predicated region
        $region25: #{tpu_custom_call.1} parent=23 // pred_check
          %p134 = pneg %p35
        $region26: #{tpu_custom_call.1} parent=23 // pred_check_branch
          %136 = sbr.rel (%p134) target = $region28
        $region27: #{tpu_custom_call.1} parent=23 // pred_region
          %s137 = sand.u32 %s25, 1
          %s138 = scalar_lea.sflag [#allocation3], %s137
          %s139 = sand.u32 %s25, 1
          %s140 = smul.addr %s139, 8
          %s141 = scalar_lea.vmem [#allocation2], %s140
          %s143 = ssub.s32 128, 128
          %144 = vsyncadd %s138, %s143
          %s145 = smul.addr %s15, 4
          %s146 = smul.addr %s145, 32
          %s147 = scalar_lea.hbm %s0, %s146
          %s149 = sshll.u32 %s141, 4
          %s150 = int_to_ptr.vmem [resolvable:$true] %s149
          %152 = dma.hbm_to_vmem [thread:$0]  %s147, 128, %s150, %s138
        $region28: #{tpu_custom_call.1} parent=23 // pred_fallthru
          _
      $region24: #{tpu_custom_call.1} parent=5 // pred_fallthru
        _
      %p153 = scmp.le.s32.totalorder 1, %s15
      %p154 = scmp.lt.s32.totalorder %s15, 3
      %p155 = pnand %p153, %p154
      %p156 = pneg %p155
      // Predicated region
      $region29: #{tpu_custom_call.1} parent=5 // pred_check
        _
      $region30: #{tpu_custom_call.1} parent=5 // pred_check_branch
        %158 = sbr.rel (%p155) target = $region32
      $region31: #{tpu_custom_call.1} parent=5 // pred_region
        %s159 = ssub.s32 %s15, 1
        %s160 = sand.u32 %s28, 1
        %s161 = scalar_lea.sflag [#allocation3], %s160
        %s162 = sand.u32 %s28, 1
        %s163 = smul.addr %s162, 8
        %s164 = scalar_lea.vmem [#allocation2], %s163
        // Predicated region
        $region33: #{tpu_custom_call.1} parent=31 // pred_check
          %p165 = pneg %p41
        $region34: #{tpu_custom_call.1} parent=31 // pred_check_branch
          %167 = sbr.rel (%p165) target = $region36
        $region35: #{tpu_custom_call.1} parent=31 // pred_region
          %168 = dma.done %s161, 128
        $region36: #{tpu_custom_call.1} parent=31 // pred_fallthru
          _
        %s169 = sand.u32 %s28, 1
        %s170 = scalar_lea.sflag [#allocation3], %s169
        %s171 = sand.u32 %s28, 1
        %s172 = smul.addr %s171, 8
        %s173 = scalar_lea.vmem [#allocation2], %s172
        %p174 = pneg %p41
        %p175 = pneg %p38
        %p176 = pneg %p62
        %p177 = pneg %p59
        %p178 = pneg %p83
        %p179 = pneg %p80
        %p180 = pneg %p109
        %p181 = pneg %p106
        %s182 = sand.u32 %s96, 1
        %s183 = scalar_lea.sflag [#allocation4], %s182
        %s184 = sand.u32 %s96, 1
        %s185 = smul.addr %s184, 24
        %s186 = scalar_lea.vmem [#allocation5], %s185
        %v188 = vld [vmem:[%s164] sm:$0x3f]
        %v189 = vld [vmem:[%s164] sm:$0xff]
        %v191 = vcombine.high %v188, %v188
        %v193 = vunpack.c.l.s4 1983009808
        %v194 = vunpack.c.0.s8 %v193
        %v195 = vlaneseq
        %v196 = vshrl.u32 %v195, 7
        %v197 = vsub.s32 %v194, %v196
        %v198 = vrot.slane %v188, %v197
        %v200 = vunpack.c.l.s4 1983009808
        %v201 = vunpack.c.0.s8 %v200
        %v202 = vlaneseq
        %v203 = vshrl.u32 %v202, 7
        %v204 = vsub.s32 %v201, %v203
        %v205 = vrot.slane %v191, %v204
        %v206 = vcombine.high %v198, %v198
        %v208 = vcombine.low %v189, %v189
        %v210 = vunpack.c.l.s4 1983009808
        %v211 = vunpack.c.0.s8 %v210
        %v212 = vlaneseq
        %v213 = vshrl.u32 %v212, 7
        %v214 = vsub.s32 %v211, %v213
        %v215 = vrot.slane %v208, %v214
        %v217 = vunpack.c.l.s4 1983009808
        %v218 = vunpack.c.0.s8 %v217
        %v219 = vlaneseq
        %v220 = vshrl.u32 %v219, 7
        %v221 = vsub.s32 %v218, %v220
        %v222 = vrot.slane %v189, %v221
        %v223 = vcombine.high %v215, %v215
        %v224 = vcombine.high %v222, %v222
        %225 = vrot.lane.b32.xlu0 %v215, 127
        %v226 = vpop.permute.xlu0 %225
        %227 = vrot.lane.b32.xlu0 %v223, 127
        %v228 = vpop.permute.xlu0 %227
        %229 = vrot.lane.b32.xlu0 %v222, 127
        %v230 = vpop.permute.xlu0 %229
        %231 = vrot.lane.b32.xlu0 %v224, 127
        %v232 = vpop.permute.xlu0 %231
        %vm233 = vcmask 1039360
        %v234 = vsel %vm233, %v226, %v228
        %v235 = vsel %vm233, %v228, %v230
        %v236 = vsel %vm233, %v230, %v232
        %v237 = vcombine.high %v189, %v189
        %v239 = vunpack.c.l.s4 1983009808
        %v240 = vunpack.c.0.s8 %v239
        %v241 = vlaneseq
        %v242 = vshrl.u32 %v241, 7
        %v243 = vsub.s32 %v240, %v242
        %v244 = vrot.slane %v237, %v243
        %v245 = vcombine.low %v222, %v222
        %v246 = vcombine.low %v244, %v244
        %247 = vrot.lane.b32.xlu0 %v245, 126
        %v248 = vpop.permute.xlu0 %247
        %249 = vrot.lane.b32.xlu0 %v222, 126
        %v250 = vpop.permute.xlu0 %249
        %251 = vrot.lane.b32.xlu0 %v246, 126
        %v252 = vpop.permute.xlu0 %251
        %253 = vrot.lane.b32.xlu0 %v244, 126
        %v254 = vpop.permute.xlu0 %253
        %vm255 = vcmask 1031168
        %v256 = vsel %vm255, %v248, %v250
        %v257 = vsel %vm255, %v250, %v252
        %v258 = vsel %vm255, %v252, %v254
        %v259 = vcombine.low %v215, %v215
        %260 = vrot.lane.b32.xlu0 %v259, 110
        %v261 = vpop.permute.xlu0 %260
        %262 = vrot.lane.b32.xlu0 %v215, 110
        %v263 = vpop.permute.xlu0 %262
        %264 = vrot.lane.b32.xlu0 %v245, 110
        %v265 = vpop.permute.xlu0 %264
        %266 = vrot.lane.b32.xlu0 %v222, 110
        %v267 = vpop.permute.xlu0 %266
        %vm268 = vcmask 900096
        %v269 = vsel %vm268, %v261, %v263
        %v270 = vsel %vm268, %v263, %v265
        %v271 = vsel %vm268, %v265, %v267
        %v272 = vcombine.high %v244, %v244
        %273 = vrot.lane.b32.xlu0 %v222, 109
        %v274 = vpop.permute.xlu0 %273
        %275 = vrot.lane.b32.xlu0 %v224, 109
        %v276 = vpop.permute.xlu0 %275
        %277 = vrot.lane.b32.xlu0 %v244, 109
        %v278 = vpop.permute.xlu0 %277
        %279 = vrot.lane.b32.xlu0 %v272, 109
        %v280 = vpop.permute.xlu0 %279
        %vm281 = vcmask 891904
        %v282 = vsel %vm281, %v274, %v276
        %v283 = vsel %vm281, %v276, %v278
        %v284 = vsel %vm281, %v278, %v280
        %285 = vrot.lane.b32.xlu0 %v215, 108
        %v286 = vpop.permute.xlu0 %285
        %287 = vrot.lane.b32.xlu0 %v223, 108
        %v288 = vpop.permute.xlu0 %287
        %289 = vrot.lane.b32.xlu0 %v222, 108
        %v290 = vpop.permute.xlu0 %289
        %291 = vrot.lane.b32.xlu0 %v224, 108
        %v292 = vpop.permute.xlu0 %291
        %vm293 = vcmask 883712
        %v294 = vsel %vm293, %v286, %v288
        %v295 = vsel %vm293, %v288, %v290
        %v296 = vsel %vm293, %v290, %v292
        %297 = vrot.lane.b32.xlu0 %v245, 92
        %v298 = vpop.permute.xlu0 %297
        %299 = vrot.lane.b32.xlu0 %v222, 92
        %v300 = vpop.permute.xlu0 %299
        %301 = vrot.lane.b32.xlu0 %v246, 92
        %v302 = vpop.permute.xlu0 %301
        %303 = vrot.lane.b32.xlu0 %v244, 92
        %v304 = vpop.permute.xlu0 %303
        %vm305 = vcmask 752640
        %v306 = vsel %vm305, %v298, %v300
        %v307 = vsel %vm305, %v300, %v302
        %v308 = vsel %vm305, %v302, %v304
        %309 = vrot.lane.b32.xlu0 %v259, 91
        %v310 = vpop.permute.xlu0 %309
        %311 = vrot.lane.b32.xlu0 %v215, 91
        %v312 = vpop.permute.xlu0 %311
        %313 = vrot.lane.b32.xlu0 %v245, 91
        %v314 = vpop.permute.xlu0 %313
        %315 = vrot.lane.b32.xlu0 %v222, 91
        %v316 = vpop.permute.xlu0 %315
        %vm317 = vcmask 744448
        %v318 = vsel %vm317, %v310, %v312
        %v319 = vsel %vm317, %v312, %v314
        %v320 = vsel %vm317, %v314, %v316
        %321 = vrot.lane.b32.xlu0 %v222, 90
        %v322 = vpop.permute.xlu0 %321
        %323 = vrot.lane.b32.xlu0 %v224, 90
        %v324 = vpop.permute.xlu0 %323
        %325 = vrot.lane.b32.xlu0 %v244, 90
        %v326 = vpop.permute.xlu0 %325
        %327 = vrot.lane.b32.xlu0 %v272, 90
        %v328 = vpop.permute.xlu0 %327
        %vm329 = vcmask 736256
        %v330 = vsel %vm329, %v322, %v324
        %v331 = vsel %vm329, %v324, %v326
        %v332 = vsel %vm329, %v326, %v328
        %vm333 = vcmask 1041408
        %v336 = vsel %vm333, %v198, %v234
        %v339 = vsel %vm333, %v206, %v235
        %v342 = vsel %vm333, %v205, %v236
        %vm343 = vcmask 1043456
        %v345 = vsel %vm343, %v336, %v256
        %v347 = vsel %vm343, %v339, %v257
        %v349 = vsel %vm343, %v342, %v258
        %vm350 = vcmask 1045504
        %v352 = vsel %vm350, %v345, %v269
        %v355 = vsel %vm350, %v347, %v270
        %v358 = vsel %vm350, %v349, %v271
        %v362 = vsel %vm333, %v282, %v294
        %v365 = vsel %vm333, %v283, %v295
        %v368 = vsel %vm333, %v284, %v296
        %v370 = vsel %vm343, %v362, %v306
        %v372 = vsel %vm343, %v365, %v307
        %v374 = vsel %vm343, %v368, %v308
        %v376 = vsel %vm350, %v370, %v318
        %v379 = vsel %vm350, %v372, %v319
        %v382 = vsel %vm350, %v374, %v320
        %v384 = vld [vmem:[%s1] sm:$0xf]
        %v385 = vld [vmem:[%s2] sm:$0xff]
        %387 = vset.pattern.permute.xlu0 0
        %388 = vperm.xlu0 %387, %v385
        %v389 = vpop.permute.xlu0 %388
        %vm391 = vcmask 293888
        %v393 = vsel %vm391, %v384, 0
        %v396 = vsel %vm333, %v330, 0
        %v399 = vsel %vm333, %v331, 0
        %v402 = vsel %vm333, %v332, 0
        %404 = vmatprep.subr.bf16.mxu0 %v355
        %405 = vmatpush1.bf16.msra.mxu0 %v352
        %406 = vmatprep.subr.bf16.mxu0 %v379
        %407 = vmatpush1.bf16.msra.mxu0 %v376
        %408 = vmatprep.subr.bf16.mxu0 %v399
        %409 = vmatpush1.bf16.msra.mxu0 %v396
        %410 = vmatprep.subr.bf16.mxu0 0
        %411 = vmatpush1.bf16.msra.mxu0 0
        %412 = vmatprep.subr.bf16.mxu0 0
        %413 = vmatpush1.bf16.msra.mxu0 0
        %414 = vmatprep.subr.bf16.mxu0 0
        %415 = vmatpush1.bf16.msra.mxu0 0
        %416 = vmatprep.subr.bf16.mxu0 0
        %417 = vmatpush1.bf16.msra.mxu0 0
        %418 = vmatprep.subr.bf16.mxu0 0
        %419 = vmatpush1.bf16.msra.mxu0 0
        %420 = vmatprep.subr.bf16.mxu0 0
        %421 = vmatpush1.bf16.msra.mxu0 0
        %422 = vmatprep.subr.bf16.mxu0 0
        %423 = vmatpush1.bf16.msra.mxu0 0
        %424 = vmatprep.subr.bf16.mxu0 0
        %425 = vmatpush1.bf16.msra.mxu0 0
        %426 = vmatprep.subr.bf16.mxu0 0
        %427 = vmatpush1.bf16.msra.mxu0 0
        %428 = vmatprep.subr.bf16.mxu0 0
        %429 = vmatpush1.bf16.msra.mxu0 0
        %430 = vmatprep.subr.bf16.mxu0 0
        %431 = vmatpush1.bf16.msra.mxu0 0
        %432 = vmatprep.subr.bf16.mxu0 0
        %433 = vmatpush1.bf16.msra.mxu0 0
        %434 = vmatprep.subr.bf16.mxu0 0
        %435 = vmatpush1.bf16.msra.mxu0 0
        %436 = vmatprep.mubr.bf16.mxu0 0
        %437 = vmatmul.mubr.bf16.gmra.mrb[0].mxu0 %v393
        %v438 = vpop.f32.mrb[0].mxu0
        %v439 = vadd.f32 %v389, %v438
        %v440 = vpop.f32.mrb[0].mxu0
        %v441 = vadd.f32 %v389, %v440
        %v442 = vpop.f32.mrb[0].mxu0
        %v443 = vpop.f32.mrb[0].mxu0
        %444 = vdwg.mxu0
        %445 = vmatprep.subr.bf16.mxu0 0
        %446 = vmatpush1.bf16.msra.mxu0 %v358
        %447 = vmatprep.subr.bf16.mxu0 0
        %448 = vmatpush1.bf16.msra.mxu0 %v382
        %449 = vmatprep.subr.bf16.mxu0 0
        %450 = vmatpush1.bf16.msra.mxu0 %v402
        %451 = vmatprep.subr.bf16.mxu0 0
        %452 = vmatpush1.bf16.msra.mxu0 0
        %453 = vmatprep.subr.bf16.mxu0 0
        %454 = vmatpush1.bf16.msra.mxu0 0
        %455 = vmatprep.subr.bf16.mxu0 0
        %456 = vmatpush1.bf16.msra.mxu0 0
        %457 = vmatprep.subr.bf16.mxu0 0
        %458 = vmatpush1.bf16.msra.mxu0 0
        %459 = vmatprep.subr.bf16.mxu0 0
        %460 = vmatpush1.bf16.msra.mxu0 0
        %461 = vmatprep.subr.bf16.mxu0 0
        %462 = vmatpush1.bf16.msra.mxu0 0
        %463 = vmatprep.subr.bf16.mxu0 0
        %464 = vmatpush1.bf16.msra.mxu0 0
        %465 = vmatprep.subr.bf16.mxu0 0
        %466 = vmatpush1.bf16.msra.mxu0 0
        %467 = vmatprep.subr.bf16.mxu0 0
        %468 = vmatpush1.bf16.msra.mxu0 0
        %469 = vmatprep.subr.bf16.mxu0 0
        %470 = vmatpush1.bf16.msra.mxu0 0
        %471 = vmatprep.subr.bf16.mxu0 0
        %472 = vmatpush1.bf16.msra.mxu0 0
        %473 = vmatprep.subr.bf16.mxu0 0
        %474 = vmatpush1.bf16.msra.mxu0 0
        %475 = vmatprep.subr.bf16.mxu0 0
        %476 = vmatpush1.bf16.msra.mxu0 0
        %477 = vmatprep.mubr.bf16.mxu0 0
        %478 = vmatmul.mubr.bf16.gmra.mrb[0].mxu0 %v393
        %v479 = vpop.f32.mrb[0].mxu0
        %v480 = vadd.f32 %v389, %v479
        %v481 = vpop.f32.mrb[0].mxu0
        %v482 = vpop.f32.mrb[0].mxu0
        %v483 = vpop.f32.mrb[0].mxu0
        %484 = vdwg.mxu0
        %v485 = vmax.f32 %v439, 0.0
        %v486 = vmax.f32 %v441, 0.0
        %v487 = vmax.f32 %v480, 0.0
        %488 = vst [vmem:[%s186] sm:$0xff] %v485
        %489 = vst [vmem:[%s186 + $0x8] sm:$0xff] %v486
        %490 = vst [vmem:[%s186 + $0x10] sm:$0xff] %v487
        %s491 = sand.u32 %s96, 1
        %s492 = scalar_lea.sflag [#allocation4], %s491
        %s493 = sand.u32 %s96, 1
        %s494 = smul.addr %s493, 24
        %s495 = scalar_lea.vmem [#allocation5], %s494
        // Predicated region
        $region37: #{tpu_custom_call.1} parent=31 // pred_check
          %p496 = pneg %p106
        $region38: #{tpu_custom_call.1} parent=31 // pred_check_branch
          %498 = sbr.rel (%p496) target = $region40
        $region39: #{tpu_custom_call.1} parent=31 // pred_region
          %s500 = ssub.s32 384, 384
          %501 = vsyncadd %s492, %s500
          %s502 = smul.addr %s20, 3
          %s503 = smul.addr %s502, 128
          %s504 = scalar_lea.hbm %s3, %s503
          %s506 = sshll.u32 %s495, 4
          %s507 = int_to_ptr.vmem [resolvable:$true] %s506
          %509 = dma.vmem_to_hbm [thread:$0]  %s507, 384, %s504, %s492
        $region40: #{tpu_custom_call.1} parent=31 // pred_fallthru
          _
      $region32: #{tpu_custom_call.1} parent=5 // pred_fallthru
        _
      %p510 = scmp.le.s32.totalorder 2, %s15
      // Predicated region
      $region41: #{tpu_custom_call.1} parent=5 // pred_check
        %p511 = pneg %p510
      $region42: #{tpu_custom_call.1} parent=5 // pred_check_branch
        %513 = sbr.rel (%p511) target = $region44
      $region43: #{tpu_custom_call.1} parent=5 // pred_region
        %s514 = ssub.s32 %s15, 2
        // Predicated region
        $region45: #{tpu_custom_call.1} parent=43 // pred_check
          %p515 = pneg %p112
        $region46: #{tpu_custom_call.1} parent=43 // pred_check_branch
          %517 = sbr.rel (%p515) target = $region48
        $region47: #{tpu_custom_call.1} parent=43 // pred_region
          %s518 = sand.u32 %s97, 1
          %s519 = scalar_lea.sflag [#allocation4], %s518
          %s520 = sand.u32 %s97, 1
          %s521 = smul.addr %s520, 24
          %s522 = scalar_lea.vmem [#allocation5], %s521
          %523 = dma.done %s519, 384
        $region48: #{tpu_custom_call.1} parent=43 // pred_fallthru
          _
      $region44: #{tpu_custom_call.1} parent=5 // pred_fallthru
        _
    $region6: #{tpu_custom_call.1} parent=1 // loop_footer
      %s19 = sadd.s32 1, %s15
    $region7: #{tpu_custom_call.1} parent=1 // loop_footer_branch
      %14 = sbr.rel target = $region3
    $region8: #{tpu_custom_call.1} parent=1 // loop_exit
      _
    %524 = vsyncpa [#allocation3], 1
    %s525 = scalar_lea.sflag [#allocation3], 1
    %526 = vsyncpa %s525, 1
    %527 = vsyncpa [#allocation4], 1
    %s528 = scalar_lea.sflag [#allocation4], 1
    %529 = vsyncpa %s528, 1

</llo_original>
